<compile_context>
chip_gen: v7x
topology: tpu7x:2x2x1
jax: 0.10.0
libtpu: 0.0.40
codegen_flags: <defaults>
</compile_context>

<pallas_src>
import functools

import jax
import jax.numpy as jnp
from jax import lax
from jax.experimental import pallas as pl
from jax.experimental.pallas import tpu as pltpu

NEG_SLOPE = 0.2          # PyG GATConv default negative_slope
MASK_NEG = -1e30         # finite "minus infinity" for masked softmax entries
LANE = 128


def _round_up(a, b):
    return ((a + b - 1) // b) * b


def _vmem_budget_bytes():
    try:
        info = pltpu.get_tpu_info()
        cap = getattr(info, "vmem_capacity_bytes", None)
        if cap:
            return int(cap) * 3 // 4
    except Exception:
        pass
    return 48 * 1024 * 1024   # conservative default (fits v7x's 64 MiB)


# ---------------------------------------------------------------------------
# Kernel 1: node transform (once per layer, tiled over node rows)
#   h = x @ W (bf16 MXU), s_src[j] = h_j . a_src, s_dst[i] = h_i . a_dst
# ---------------------------------------------------------------------------
def gat_transform_kernel(x_ref, w_ref, att_ref, h_ref, ssrc_ref, sdst_ref):
    x = x_ref[...]                                                    # (tm, Fin_p)
    w = w_ref[...]                                                    # (Fin_p, Fout_p)
    h = jnp.dot(x.astype(jnp.bfloat16), w.astype(jnp.bfloat16),
                preferred_element_type=jnp.float32)                   # (tm, Fout_p) f32

    att = att_ref[...]                                                # (2, Fout_p) f32
    # Lane-dense source-score row (1, tm) and dst-score column (tm, 1), f32.
    ssrc_ref[...] = lax.dot_general(att[0:1, :], h, (((1,), (1,)), ((), ())),
                                    preferred_element_type=jnp.float32)
    sdst_ref[...] = jnp.sum(h * att[1:2, :], axis=-1, keepdims=True)

    h_ref[...] = h.astype(h_ref.dtype)                                # bf16


# ---------------------------------------------------------------------------
# Kernel 2: attention + aggregation for a tile of destination nodes
# ---------------------------------------------------------------------------
def gat_attention_kernel(h_ref, ssrc_ref, sdst_ref, bias_ref, adj_ref, o_ref,
                         *, activation, fout_real):
    # h_ref:(N_p,Fout_p) bf16  ssrc_ref:(1,N_p) f32  sdst_ref:(tm,1) f32
    # bias_ref:(1,Fout_p) f32  adj_ref:(tm,N_p) bf16 edge counts (incl. self-loops)
    e = sdst_ref[...] + ssrc_ref[...]                                 # (tm, N_p) f32
    e = jnp.maximum(e, NEG_SLOPE * e)                                 # LeakyReLU
    c = adj_ref[...].astype(jnp.float32)                              # counts
    e = jnp.where(c > 0, e, MASK_NEG)                                 # mask non-edges
    m = jnp.max(e, axis=-1, keepdims=True)
    p = c * jnp.exp(e - m)            # multiplicity-weighted (exact for multigraphs)
    den = jnp.sum(p, axis=-1, keepdims=True)                          # (tm, 1)

    # Unnormalized aggregation on the MXU (bf16), normalize the small result.
    agg = jnp.dot(p.astype(jnp.bfloat16), h_ref[...],
                  preferred_element_type=jnp.float32)                 # (tm, Fout_p)
    out = agg * pl.reciprocal(den, approx=True) + bias_ref[...]

    if activation == "relu":
        out = jnp.maximum(out, 0.0)
    else:  # "log_softmax" over the real (unpadded) class columns only
        col = lax.broadcasted_iota(jnp.int32, out.shape, 1)
        out = jnp.where(col < fout_real, out, MASK_NEG)
        mm = jnp.max(out, axis=-1, keepdims=True)
        sh = out - mm
        out = sh - jnp.log(jnp.sum(jnp.exp(sh), axis=-1, keepdims=True))

    o_ref[...] = out.astype(o_ref.dtype)


# ---------------------------------------------------------------------------
# pallas_call wrappers
# ---------------------------------------------------------------------------
def _tile_and_pad(n, fout_pad_max):
    """Destination-row tile and padded node count (VMEM-aware, tile mult. of 128)."""
    n8 = _round_up(n, 8)
    if n8 <= 256:
        return n8, n8
    budget = _vmem_budget_bytes()
    for tm in (512, 256, 128):
        n_p = _round_up(n, tm)
        per_tile = tm * n_p * (2 * 2 + 2 * 4) + 2 * tm * fout_pad_max * 4
        resident = n_p * fout_pad_max * 2 + 2 * n_p * 4
        if per_tile + resident <= budget:
            return tm, n_p
    return 128, _round_up(n, 128)


def gat_transform(x, w, att, *, tm, vmem_limit):
    n_p, fin_p = x.shape
    fout_p = w.shape[1]
    return pl.pallas_call(
        gat_transform_kernel,
        out_shape=(
            jax.ShapeDtypeStruct((n_p, fout_p), jnp.bfloat16),   # h
            jax.ShapeDtypeStruct((1, n_p), jnp.float32),          # s_src row
            jax.ShapeDtypeStruct((n_p, 1), jnp.float32),          # s_dst column
        ),
        grid_spec=pltpu.PrefetchScalarGridSpec(
            num_scalar_prefetch=0,
            grid=(n_p // tm,),
            in_specs=[
                pl.BlockSpec((tm, fin_p), lambda i: (i, 0)),       # x tile
                pl.BlockSpec((fin_p, fout_p), lambda i: (0, 0)),   # W (resident)
                pl.BlockSpec((2, fout_p), lambda i: (0, 0)),       # [a_src; a_dst]
            ],
            out_specs=[
                pl.BlockSpec((tm, fout_p), lambda i: (i, 0)),
                pl.BlockSpec((1, tm), lambda i: (0, i)),
                pl.BlockSpec((tm, 1), lambda i: (i, 0)),
            ],
        ),
        compiler_params=pltpu.CompilerParams(
            dimension_semantics=("parallel",),
            vmem_limit_bytes=vmem_limit),
    )(x, w, att)


def gat_attention(h, ssrc, sdst, bias, adj, *, tm, activation, fout_real,
                  out_dtype, vmem_limit):
    n_p, fout_p = h.shape
    kernel = functools.partial(gat_attention_kernel,
                               activation=activation, fout_real=fout_real)
    return pl.pallas_call(
        kernel,
        out_shape=jax.ShapeDtypeStruct((n_p, fout_p), out_dtype),
        grid_spec=pltpu.PrefetchScalarGridSpec(
            num_scalar_prefetch=0,
            grid=(n_p // tm,),
            in_specs=[
                pl.BlockSpec((n_p, fout_p), lambda i: (0, 0)),     # h (resident)
                pl.BlockSpec((1, n_p), lambda i: (0, 0)),          # source scores
                pl.BlockSpec((tm, 1), lambda i: (i, 0)),           # dst scores (tile)
                pl.BlockSpec((1, fout_p), lambda i: (0, 0)),       # bias
                pl.BlockSpec((tm, n_p), lambda i: (i, 0)),         # adj counts (tile)
            ],
            out_specs=pl.BlockSpec((tm, fout_p), lambda i: (i, 0)),
        ),
        compiler_params=pltpu.CompilerParams(
            dimension_semantics=("parallel",),
            vmem_limit_bytes=vmem_limit),
    )(h, ssrc, sdst, bias, adj)


def _pad2(a, rows, cols):
    return jnp.pad(a, ((0, rows - a.shape[0]), (0, cols - a.shape[1])))


def gat_forward(x, adj_counts, params):
    """Full GAT forward (num_layers=2, heads=1, dropout=0.0 -> no-op)."""
    (w1, att1, b1), (w2, att2, b2) = params
    n, fin = x.shape
    hid = w1.shape[1]
    ncls = w2.shape[1]

    fin_p, hid_p, cls_p = (_round_up(d, LANE) for d in (fin, hid, ncls))
    tm, n_p = _tile_and_pad(n, max(hid_p, cls_p))
    vmem_limit = _vmem_budget_bytes()

    # --- pad graph / parameters (zero padding keeps the math exact) ---------
    x_p = _pad2(x.astype(jnp.float32), n_p, fin_p)
    adj_p = _pad2(adj_counts.astype(jnp.float32), n_p, n_p)
    if n_p > n:
        # Self-loop on padded destination rows so the softmax denominator != 0.
        adj_p = adj_p + jnp.diag((jnp.arange(n_p) >= n).astype(jnp.float32))
    adj_p = adj_p.astype(jnp.bfloat16)       # exact for integer counts <= 256

    w1_p = _pad2(w1, fin_p, hid_p).astype(jnp.bfloat16)
    att1_p = _pad2(att1, 2, hid_p).astype(jnp.float32)
    b1_p = _pad2(b1, 1, hid_p).astype(jnp.float32)
    w2_p = _pad2(w2, hid_p, cls_p).astype(jnp.bfloat16)
    att2_p = _pad2(att2, 2, cls_p).astype(jnp.float32)
    b2_p = _pad2(b2, 1, cls_p).astype(jnp.float32)

    # --- layer 1: GATConv + fused ReLU --------------------------------------
    h1, s1, d1 = gat_transform(x_p, w1_p, att1_p, tm=tm, vmem_limit=vmem_limit)
    x2 = gat_attention(h1, s1, d1, b1_p, adj_p, tm=tm, activation="relu",
                       fout_real=hid, out_dtype=jnp.bfloat16, vmem_limit=vmem_limit)
    # F.dropout(p=0.0) is an exact no-op.

    # --- layer 2: GATConv + fused log_softmax -------------------------------
    h2, s2, d2 = gat_transform(x2, w2_p, att2_p, tm=tm, vmem_limit=vmem_limit)
    out = gat_attention(h2, s2, d2, b2_p, adj_p, tm=tm, activation="log_softmax",
                        fout_real=ncls, out_dtype=jnp.float32, vmem_limit=vmem_limit)
    return out[:n, :ncls]


# ---------------------------------------------------------------------------
# Parameter / graph construction (plain-JAX glue)
# ---------------------------------------------------------------------------
def make_layer_params(key, fin, fout):
    k0, k1, k2, k3 = jax.random.split(key, 4)
    w = jax.random.normal(k0, (fin, fout), jnp.float32) * (1.0 / jnp.sqrt(fin))
    a_src = jax.random.normal(k1, (1, fout), jnp.float32) * 0.1
    a_dst = jax.random.normal(k2, (1, fout), jnp.float32) * 0.1
    att = jnp.concatenate([a_src, a_dst], axis=0)          # (2, Fout)
    bias = jax.random.normal(k3, (1, fout), jnp.float32) * 0.05
    return w, att, bias


def make_adj_counts(src, dst, num_nodes):
    """Dense (N, N): adj[i, j] = multiplicity of edge j->i, existing self-loops
    removed and exactly one self-loop per node added (PyG add_self_loops=True)."""
    not_self = (src != dst).astype(jnp.float32)
    src_oh = jax.nn.one_hot(src, num_nodes, dtype=jnp.float32)   # (E, N)
    dst_oh = jax.nn.one_hot(dst, num_nodes, dtype=jnp.float32)   # (E, N)
    counts = jnp.einsum("ei,ej->ij", dst_oh, src_oh * not_self[:, None])
    return counts + jnp.eye(num_nodes, dtype=jnp.float32)


if __name__ == "__main__":
    N, E = 16, 64                    # nodes, edges
    F_IN, HIDDEN, N_CLASSES = 8, 32, 4

    key = jax.random.PRNGKey(0)
    kx, ksrc, kdst, kp1, kp2 = jax.random.split(key, 5)

    # Graph data (equivalent of data.x, data.edge_index).
    x = jax.random.normal(kx, (N, F_IN), jnp.float32)
    src = jax.random.randint(ksrc, (E,), 0, N)
    dst = jax.random.randint(kdst, (E,), 0, N)

    adj = make_adj_counts(src, dst, N)
    params = (make_layer_params(kp1, F_IN, HIDDEN),
              make_layer_params(kp2, HIDDEN, N_CLASSES))

    fwd = jax.jit(gat_forward)
    out = fwd(x, adj, params)
    out = jax.block_until_ready(out)

    assert out.shape == (N, N_CLASSES)
    assert bool(jnp.all(jnp.isfinite(out)))
    # log_softmax rows should exponentiate-sum to ~1.
    assert bool(jnp.all(jnp.abs(jnp.sum(jnp.exp(out), axis=1) - 1.0) < 1e-3))

    print("KERNEL_OK")
</pallas_src>

<mosaic_0001>
module attributes {stable_mosaic.version = 11 : i64} {
  func.func @gat_transform_kernel(%arg0: i32, %arg1: memref<16x128xf32, #tpu.memory_space<vmem>>, %arg2: memref<128x128xbf16, #tpu.memory_space<vmem>>, %arg3: memref<2x128xf32, #tpu.memory_space<vmem>>, %arg4: memref<16x128xbf16, #tpu.memory_space<vmem>>, %arg5: memref<1x16xf32, #tpu.memory_space<vmem>>, %arg6: memref<16x1xf32, #tpu.memory_space<vmem>>) attributes {dimension_semantics = [#tpu.dimension_semantics<parallel>], iteration_bounds = array<i64: 1>, scalar_prefetch = 0 : i64, scratch_operands = 0 : i64, tpu.core_type = #tpu.core_type<tc>, window_params = [{transform_indices = @transform_0, window_bounds = array<i64: 16, 128>}, {pipeline_mode = #tpu.pipeline_mode<synchronous>, transform_indices = @transform_1, window_bounds = array<i64: 128, 128>}, {pipeline_mode = #tpu.pipeline_mode<synchronous>, transform_indices = @transform_2, window_bounds = array<i64: 2, 128>}, {transform_indices = @transform_3, window_bounds = array<i64: 16, 128>}, {transform_indices = @transform_4, window_bounds = array<i64: 1, 16>}, {transform_indices = @transform_5, window_bounds = array<i64: 16, 1>}]} {
    %c0 = arith.constant 0 : index
    %c0_0 = arith.constant 0 : index
    %0 = vector.load %arg1[%c0, %c0_0] : memref<16x128xf32, #tpu.memory_space<vmem>>, vector<16x128xf32>
    %c0_1 = arith.constant 0 : index
    %c0_2 = arith.constant 0 : index
    %1 = vector.load %arg2[%c0_1, %c0_2] : memref<128x128xbf16, #tpu.memory_space<vmem>>, vector<128x128xbf16>
    %2 = arith.truncf %0 : vector<16x128xf32> to vector<16x128xbf16>
    %cst = arith.constant dense<0.000000e+00> : vector<16x128xf32>
    %3 = tpu.matmul %2, %1, %cst {dimension_numbers = #tpu.dot_dimension_numbers<[1], [0], [0], [1], [0, 0, 1, 1], [], []>} : vector<16x128xbf16>, vector<128x128xbf16>, vector<16x128xf32> -> vector<16x128xf32>
    %c0_3 = arith.constant 0 : index
    %c0_4 = arith.constant 0 : index
    %4 = vector.load %arg3[%c0_3, %c0_4] : memref<2x128xf32, #tpu.memory_space<vmem>>, vector<2x128xf32>
    %5 = vector.extract_strided_slice %4 {offsets = [0, 0], sizes = [1, 128], strides = [1, 1]} : vector<2x128xf32> to vector<1x128xf32>
    %cst_5 = arith.constant dense<0.000000e+00> : vector<1x16xf32>
    %6 = tpu.matmul %5, %3, %cst_5 {dimension_numbers = #tpu.dot_dimension_numbers<[1], [1], [0], [0], [0, 0, 1, 0], [], []>} : vector<1x128xf32>, vector<16x128xf32>, vector<1x16xf32> -> vector<1x16xf32>
    %c0_6 = arith.constant 0 : index
    %c0_7 = arith.constant 0 : index
    %7 = vector.load %arg5[%c0_6, %c0_7] : memref<1x16xf32, #tpu.memory_space<vmem>>, vector<1x16xf32>
    tpu.vector_store %arg5[%c0_6, %c0_7], %6 {strides = array<i32>} : memref<1x16xf32, #tpu.memory_space<vmem>>, vector<1x16xf32>,
    %8 = vector.extract_strided_slice %4 {offsets = [1, 0], sizes = [1, 128], strides = [1, 1]} : vector<2x128xf32> to vector<1x128xf32>
    %9 = vector.broadcast %8 : vector<1x128xf32> to vector<16x128xf32>
    %10 = arith.mulf %3, %9 : vector<16x128xf32>
    %cst_8 = arith.constant dense<0.000000e+00> : vector<16xf32>
    %11 = vector.multi_reduction <add>, %10, %cst_8 [1] : vector<16x128xf32> to vector<16xf32>
    %12 = vector.shape_cast %11 : vector<16xf32> to vector<16x1xf32>
    %c0_9 = arith.constant 0 : index
    %c0_10 = arith.constant 0 : index
    %13 = vector.load %arg6[%c0_9, %c0_10] : memref<16x1xf32, #tpu.memory_space<vmem>>, vector<16x1xf32>
    tpu.vector_store %arg6[%c0_9, %c0_10], %12 {strides = array<i32>} : memref<16x1xf32, #tpu.memory_space<vmem>>, vector<16x1xf32>,
    %14 = arith.truncf %3 : vector<16x128xf32> to vector<16x128xbf16>
    %c0_11 = arith.constant 0 : index
    %c0_12 = arith.constant 0 : index
    %15 = vector.load %arg4[%c0_11, %c0_12] : memref<16x128xbf16, #tpu.memory_space<vmem>>, vector<16x128xbf16>
    tpu.vector_store %arg4[%c0_11, %c0_12], %14 {strides = array<i32>} : memref<16x128xbf16, #tpu.memory_space<vmem>>, vector<16x128xbf16>,
    return
  }
  func.func @transform_0(%arg0: i32) -> (i32, i32) {
    %c0_i32 = arith.constant 0 : i32
    %c0_i32_0 = arith.constant 0 : i32
    return %arg0, %c0_i32 : i32, i32
  }
  func.func @transform_1(%arg0: i32) -> (i32, i32) {
    %c0_i32 = arith.constant 0 : i32
    %c0_i32_0 = arith.constant 0 : i32
    %c0_i32_1 = arith.constant 0 : i32
    return %c0_i32, %c0_i32_0 : i32, i32
  }
  func.func @transform_2(%arg0: i32) -> (i32, i32) {
    %c0_i32 = arith.constant 0 : i32
    %c0_i32_0 = arith.constant 0 : i32
    %c0_i32_1 = arith.constant 0 : i32
    return %c0_i32, %c0_i32_0 : i32, i32
  }
  func.func @transform_3(%arg0: i32) -> (i32, i32) {
    %c0_i32 = arith.constant 0 : i32
    %c0_i32_0 = arith.constant 0 : i32
    return %arg0, %c0_i32 : i32, i32
  }
  func.func @transform_4(%arg0: i32) -> (i32, i32) {
    %c0_i32 = arith.constant 0 : i32
    %c0_i32_0 = arith.constant 0 : i32
    return %c0_i32, %arg0 : i32, i32
  }
  func.func @transform_5(%arg0: i32) -> (i32, i32) {
    %c0_i32 = arith.constant 0 : i32
    %c0_i32_0 = arith.constant 0 : i32
    return %arg0, %c0_i32 : i32, i32
  }
}

module attributes {stable_mosaic.version = 11 : i64} {
  func.func @gat_attention_kernel(%arg0: i32, %arg1: memref<16x128xbf16, #tpu.memory_space<vmem>>, %arg2: memref<1x16xf32, #tpu.memory_space<vmem>>, %arg3: memref<16x1xf32, #tpu.memory_space<vmem>>, %arg4: memref<1x128xf32, #tpu.memory_space<vmem>>, %arg5: memref<16x16xbf16, #tpu.memory_space<vmem>>, %arg6: memref<16x128xbf16, #tpu.memory_space<vmem>>) attributes {dimension_semantics = [#tpu.dimension_semantics<parallel>], iteration_bounds = array<i64: 1>, scalar_prefetch = 0 : i64, scratch_operands = 0 : i64, tpu.core_type = #tpu.core_type<tc>, window_params = [{pipeline_mode = #tpu.pipeline_mode<synchronous>, transform_indices = @transform_0, window_bounds = array<i64: 16, 128>}, {pipeline_mode = #tpu.pipeline_mode<synchronous>, transform_indices = @transform_1, window_bounds = array<i64: 1, 16>}, {transform_indices = @transform_2, window_bounds = array<i64: 16, 1>}, {pipeline_mode = #tpu.pipeline_mode<synchronous>, transform_indices = @transform_3, window_bounds = array<i64: 1, 128>}, {transform_indices = @transform_4, window_bounds = array<i64: 16, 16>}, {transform_indices = @transform_5, window_bounds = array<i64: 16, 128>}]} {
    %c0 = arith.constant 0 : index
    %c0_0 = arith.constant 0 : index
    %0 = vector.load %arg3[%c0, %c0_0] : memref<16x1xf32, #tpu.memory_space<vmem>>, vector<16x1xf32>
    %c0_1 = arith.constant 0 : index
    %c0_2 = arith.constant 0 : index
    %1 = vector.load %arg2[%c0_1, %c0_2] : memref<1x16xf32, #tpu.memory_space<vmem>>, vector<1x16xf32>
    %2 = vector.broadcast %0 : vector<16x1xf32> to vector<16x16xf32>
    %3 = vector.broadcast %1 : vector<1x16xf32> to vector<16x16xf32>
    %4 = arith.addf %2, %3 : vector<16x16xf32>
    %cst = arith.constant 2.000000e-01 : f32
    %5 = vector.broadcast %cst : f32 to vector<16x16xf32>
    %6 = arith.mulf %5, %4 : vector<16x16xf32>
    %7 = arith.maximumf %4, %6 : vector<16x16xf32>
    %c0_3 = arith.constant 0 : index
    %c0_4 = arith.constant 0 : index
    %8 = vector.load %arg5[%c0_3, %c0_4] : memref<16x16xbf16, #tpu.memory_space<vmem>>, vector<16x16xbf16>
    %9 = arith.extf %8 : vector<16x16xbf16> to vector<16x16xf32>
    %cst_5 = arith.constant 0.000000e+00 : f32
    %10 = vector.broadcast %cst_5 : f32 to vector<16x16xf32>
    %11 = arith.cmpf ogt, %9, %10 : vector<16x16xf32>
    %cst_6 = arith.constant -1.000000e+30 : f32
    %12 = vector.broadcast %cst_6 : f32 to vector<16x16xf32>
    %13 = arith.select %11, %7, %12 : vector<16x16xi1>, vector<16x16xf32>
    %cst_7 = arith.constant dense<0xFF800000> : vector<16xf32>
    %14 = vector.multi_reduction <maximumf>, %13, %cst_7 [1] : vector<16x16xf32> to vector<16xf32>
    %15 = vector.shape_cast %14 : vector<16xf32> to vector<16x1xf32>
    %16 = vector.broadcast %15 : vector<16x1xf32> to vector<16x16xf32>
    %17 = arith.subf %13, %16 : vector<16x16xf32>
    %18 = math.exp %17 : vector<16x16xf32>
    %19 = arith.mulf %9, %18 : vector<16x16xf32>
    %cst_8 = arith.constant dense<0.000000e+00> : vector<16xf32>
    %20 = vector.multi_reduction <add>, %19, %cst_8 [1] : vector<16x16xf32> to vector<16xf32>
    %21 = vector.shape_cast %20 : vector<16xf32> to vector<16x1xf32>
    %22 = arith.truncf %19 : vector<16x16xf32> to vector<16x16xbf16>
    %c0_9 = arith.constant 0 : index
    %c0_10 = arith.constant 0 : index
    %23 = vector.load %arg1[%c0_9, %c0_10] : memref<16x128xbf16, #tpu.memory_space<vmem>>, vector<16x128xbf16>
    %cst_11 = arith.constant dense<0.000000e+00> : vector<16x128xf32>
    %24 = tpu.matmul %22, %23, %cst_11 {dimension_numbers = #tpu.dot_dimension_numbers<[1], [0], [0], [1], [0, 0, 1, 1], [], []>} : vector<16x16xbf16>, vector<16x128xbf16>, vector<16x128xf32> -> vector<16x128xf32>
    %25 = tpu.reciprocal %21 {approx = true} : vector<16x1xf32> -> vector<16x1xf32>
    %26 = vector.broadcast %25 : vector<16x1xf32> to vector<16x128xf32>
    %27 = arith.mulf %24, %26 : vector<16x128xf32>
    %c0_12 = arith.constant 0 : index
    %c0_13 = arith.constant 0 : index
    %28 = vector.load %arg4[%c0_12, %c0_13] : memref<1x128xf32, #tpu.memory_space<vmem>>, vector<1x128xf32>
    %29 = vector.broadcast %28 : vector<1x128xf32> to vector<16x128xf32>
    %30 = arith.addf %27, %29 : vector<16x128xf32>
    %cst_14 = arith.constant 0.000000e+00 : f32
    %31 = vector.broadcast %cst_14 : f32 to vector<16x128xf32>
    %32 = arith.maximumf %30, %31 : vector<16x128xf32>
    %33 = arith.truncf %32 : vector<16x128xf32> to vector<16x128xbf16>
    %c0_15 = arith.constant 0 : index
    %c0_16 = arith.constant 0 : index
    %34 = vector.load %arg6[%c0_15, %c0_16] : memref<16x128xbf16, #tpu.memory_space<vmem>>, vector<16x128xbf16>
    tpu.vector_store %arg6[%c0_15, %c0_16], %33 {strides = array<i32>} : memref<16x128xbf16, #tpu.memory_space<vmem>>, vector<16x128xbf16>,
    return
  }
  func.func @transform_0(%arg0: i32) -> (i32, i32) {
    %c0_i32 = arith.constant 0 : i32
    %c0_i32_0 = arith.constant 0 : i32
    %c0_i32_1 = arith.constant 0 : i32
    return %c0_i32, %c0_i32_0 : i32, i32
  }
  func.func @transform_1(%arg0: i32) -> (i32, i32) {
    %c0_i32 = arith.constant 0 : i32
    %c0_i32_0 = arith.constant 0 : i32
    %c0_i32_1 = arith.constant 0 : i32
    return %c0_i32, %c0_i32_0 : i32, i32
  }
  func.func @transform_2(%arg0: i32) -> (i32, i32) {
    %c0_i32 = arith.constant 0 : i32
    %c0_i32_0 = arith.constant 0 : i32
    return %arg0, %c0_i32 : i32, i32
  }
  func.func @transform_3(%arg0: i32) -> (i32, i32) {
    %c0_i32 = arith.constant 0 : i32
    %c0_i32_0 = arith.constant 0 : i32
    %c0_i32_1 = arith.constant 0 : i32
    return %c0_i32, %c0_i32_0 : i32, i32
  }
  func.func @transform_4(%arg0: i32) -> (i32, i32) {
    %c0_i32 = arith.constant 0 : i32
    %c0_i32_0 = arith.constant 0 : i32
    return %arg0, %c0_i32 : i32, i32
  }
  func.func @transform_5(%arg0: i32) -> (i32, i32) {
    %c0_i32 = arith.constant 0 : i32
    %c0_i32_0 = arith.constant 0 : i32
    return %arg0, %c0_i32 : i32, i32
  }
}

module attributes {stable_mosaic.version = 11 : i64} {
  func.func @gat_transform_kernel(%arg0: i32, %arg1: memref<16x128xbf16, #tpu.memory_space<vmem>>, %arg2: memref<128x128xbf16, #tpu.memory_space<vmem>>, %arg3: memref<2x128xf32, #tpu.memory_space<vmem>>, %arg4: memref<16x128xbf16, #tpu.memory_space<vmem>>, %arg5: memref<1x16xf32, #tpu.memory_space<vmem>>, %arg6: memref<16x1xf32, #tpu.memory_space<vmem>>) attributes {dimension_semantics = [#tpu.dimension_semantics<parallel>], iteration_bounds = array<i64: 1>, scalar_prefetch = 0 : i64, scratch_operands = 0 : i64, tpu.core_type = #tpu.core_type<tc>, window_params = [{transform_indices = @transform_0, window_bounds = array<i64: 16, 128>}, {pipeline_mode = #tpu.pipeline_mode<synchronous>, transform_indices = @transform_1, window_bounds = array<i64: 128, 128>}, {pipeline_mode = #tpu.pipeline_mode<synchronous>, transform_indices = @transform_2, window_bounds = array<i64: 2, 128>}, {transform_indices = @transform_3, window_bounds = array<i64: 16, 128>}, {transform_indices = @transform_4, window_bounds = array<i64: 1, 16>}, {transform_indices = @transform_5, window_bounds = array<i64: 16, 1>}]} {
    %c0 = arith.constant 0 : index
    %c0_0 = arith.constant 0 : index
    %0 = vector.load %arg1[%c0, %c0_0] : memref<16x128xbf16, #tpu.memory_space<vmem>>, vector<16x128xbf16>
    %c0_1 = arith.constant 0 : index
    %c0_2 = arith.constant 0 : index
    %1 = vector.load %arg2[%c0_1, %c0_2] : memref<128x128xbf16, #tpu.memory_space<vmem>>, vector<128x128xbf16>
    %cst = arith.constant dense<0.000000e+00> : vector<16x128xf32>
    %2 = tpu.matmul %0, %1, %cst {dimension_numbers = #tpu.dot_dimension_numbers<[1], [0], [0], [1], [0, 0, 1, 1], [], []>} : vector<16x128xbf16>, vector<128x128xbf16>, vector<16x128xf32> -> vector<16x128xf32>
    %c0_3 = arith.constant 0 : index
    %c0_4 = arith.constant 0 : index
    %3 = vector.load %arg3[%c0_3, %c0_4] : memref<2x128xf32, #tpu.memory_space<vmem>>, vector<2x128xf32>
    %4 = vector.extract_strided_slice %3 {offsets = [0, 0], sizes = [1, 128], strides = [1, 1]} : vector<2x128xf32> to vector<1x128xf32>
    %cst_5 = arith.constant dense<0.000000e+00> : vector<1x16xf32>
    %5 = tpu.matmul %4, %2, %cst_5 {dimension_numbers = #tpu.dot_dimension_numbers<[1], [1], [0], [0], [0, 0, 1, 0], [], []>} : vector<1x128xf32>, vector<16x128xf32>, vector<1x16xf32> -> vector<1x16xf32>
    %c0_6 = arith.constant 0 : index
    %c0_7 = arith.constant 0 : index
    %6 = vector.load %arg5[%c0_6, %c0_7] : memref<1x16xf32, #tpu.memory_space<vmem>>, vector<1x16xf32>
    tpu.vector_store %arg5[%c0_6, %c0_7], %5 {strides = array<i32>} : memref<1x16xf32, #tpu.memory_space<vmem>>, vector<1x16xf32>,
    %7 = vector.extract_strided_slice %3 {offsets = [1, 0], sizes = [1, 128], strides = [1, 1]} : vector<2x128xf32> to vector<1x128xf32>
    %8 = vector.broadcast %7 : vector<1x128xf32> to vector<16x128xf32>
    %9 = arith.mulf %2, %8 : vector<16x128xf32>
    %cst_8 = arith.constant dense<0.000000e+00> : vector<16xf32>
    %10 = vector.multi_reduction <add>, %9, %cst_8 [1] : vector<16x128xf32> to vector<16xf32>
    %11 = vector.shape_cast %10 : vector<16xf32> to vector<16x1xf32>
    %c0_9 = arith.constant 0 : index
    %c0_10 = arith.constant 0 : index
    %12 = vector.load %arg6[%c0_9, %c0_10] : memref<16x1xf32, #tpu.memory_space<vmem>>, vector<16x1xf32>
    tpu.vector_store %arg6[%c0_9, %c0_10], %11 {strides = array<i32>} : memref<16x1xf32, #tpu.memory_space<vmem>>, vector<16x1xf32>,
    %13 = arith.truncf %2 : vector<16x128xf32> to vector<16x128xbf16>
    %c0_11 = arith.constant 0 : index
    %c0_12 = arith.constant 0 : index
    %14 = vector.load %arg4[%c0_11, %c0_12] : memref<16x128xbf16, #tpu.memory_space<vmem>>, vector<16x128xbf16>
    tpu.vector_store %arg4[%c0_11, %c0_12], %13 {strides = array<i32>} : memref<16x128xbf16, #tpu.memory_space<vmem>>, vector<16x128xbf16>,
    return
  }
  func.func @transform_0(%arg0: i32) -> (i32, i32) {
    %c0_i32 = arith.constant 0 : i32
    %c0_i32_0 = arith.constant 0 : i32
    return %arg0, %c0_i32 : i32, i32
  }
  func.func @transform_1(%arg0: i32) -> (i32, i32) {
    %c0_i32 = arith.constant 0 : i32
    %c0_i32_0 = arith.constant 0 : i32
    %c0_i32_1 = arith.constant 0 : i32
    return %c0_i32, %c0_i32_0 : i32, i32
  }
  func.func @transform_2(%arg0: i32) -> (i32, i32) {
    %c0_i32 = arith.constant 0 : i32
    %c0_i32_0 = arith.constant 0 : i32
    %c0_i32_1 = arith.constant 0 : i32
    return %c0_i32, %c0_i32_0 : i32, i32
  }
  func.func @transform_3(%arg0: i32) -> (i32, i32) {
    %c0_i32 = arith.constant 0 : i32
    %c0_i32_0 = arith.constant 0 : i32
    return %arg0, %c0_i32 : i32, i32
  }
  func.func @transform_4(%arg0: i32) -> (i32, i32) {
    %c0_i32 = arith.constant 0 : i32
    %c0_i32_0 = arith.constant 0 : i32
    return %c0_i32, %arg0 : i32, i32
  }
  func.func @transform_5(%arg0: i32) -> (i32, i32) {
    %c0_i32 = arith.constant 0 : i32
    %c0_i32_0 = arith.constant 0 : i32
    return %arg0, %c0_i32 : i32, i32
  }
}

module attributes {stable_mosaic.version = 11 : i64} {
  func.func @gat_attention_kernel(%arg0: i32, %arg1: memref<16x128xbf16, #tpu.memory_space<vmem>>, %arg2: memref<1x16xf32, #tpu.memory_space<vmem>>, %arg3: memref<16x1xf32, #tpu.memory_space<vmem>>, %arg4: memref<1x128xf32, #tpu.memory_space<vmem>>, %arg5: memref<16x16xbf16, #tpu.memory_space<vmem>>, %arg6: memref<16x128xf32, #tpu.memory_space<vmem>>) attributes {dimension_semantics = [#tpu.dimension_semantics<parallel>], iteration_bounds = array<i64: 1>, scalar_prefetch = 0 : i64, scratch_operands = 0 : i64, tpu.core_type = #tpu.core_type<tc>, window_params = [{pipeline_mode = #tpu.pipeline_mode<synchronous>, transform_indices = @transform_0, window_bounds = array<i64: 16, 128>}, {pipeline_mode = #tpu.pipeline_mode<synchronous>, transform_indices = @transform_1, window_bounds = array<i64: 1, 16>}, {transform_indices = @transform_2, window_bounds = array<i64: 16, 1>}, {pipeline_mode = #tpu.pipeline_mode<synchronous>, transform_indices = @transform_3, window_bounds = array<i64: 1, 128>}, {transform_indices = @transform_4, window_bounds = array<i64: 16, 16>}, {transform_indices = @transform_5, window_bounds = array<i64: 16, 128>}]} {
    %c0 = arith.constant 0 : index
    %c0_0 = arith.constant 0 : index
    %0 = vector.load %arg3[%c0, %c0_0] : memref<16x1xf32, #tpu.memory_space<vmem>>, vector<16x1xf32>
    %c0_1 = arith.constant 0 : index
    %c0_2 = arith.constant 0 : index
    %1 = vector.load %arg2[%c0_1, %c0_2] : memref<1x16xf32, #tpu.memory_space<vmem>>, vector<1x16xf32>
    %2 = vector.broadcast %0 : vector<16x1xf32> to vector<16x16xf32>
    %3 = vector.broadcast %1 : vector<1x16xf32> to vector<16x16xf32>
    %4 = arith.addf %2, %3 : vector<16x16xf32>
    %cst = arith.constant 2.000000e-01 : f32
    %5 = vector.broadcast %cst : f32 to vector<16x16xf32>
    %6 = arith.mulf %5, %4 : vector<16x16xf32>
    %7 = arith.maximumf %4, %6 : vector<16x16xf32>
    %c0_3 = arith.constant 0 : index
    %c0_4 = arith.constant 0 : index
    %8 = vector.load %arg5[%c0_3, %c0_4] : memref<16x16xbf16, #tpu.memory_space<vmem>>, vector<16x16xbf16>
    %9 = arith.extf %8 : vector<16x16xbf16> to vector<16x16xf32>
    %cst_5 = arith.constant 0.000000e+00 : f32
    %10 = vector.broadcast %cst_5 : f32 to vector<16x16xf32>
    %11 = arith.cmpf ogt, %9, %10 : vector<16x16xf32>
    %cst_6 = arith.constant -1.000000e+30 : f32
    %12 = vector.broadcast %cst_6 : f32 to vector<16x16xf32>
    %13 = arith.select %11, %7, %12 : vector<16x16xi1>, vector<16x16xf32>
    %cst_7 = arith.constant dense<0xFF800000> : vector<16xf32>
    %14 = vector.multi_reduction <maximumf>, %13, %cst_7 [1] : vector<16x16xf32> to vector<16xf32>
    %15 = vector.shape_cast %14 : vector<16xf32> to vector<16x1xf32>
    %16 = vector.broadcast %15 : vector<16x1xf32> to vector<16x16xf32>
    %17 = arith.subf %13, %16 : vector<16x16xf32>
    %18 = math.exp %17 : vector<16x16xf32>
    %19 = arith.mulf %9, %18 : vector<16x16xf32>
    %cst_8 = arith.constant dense<0.000000e+00> : vector<16xf32>
    %20 = vector.multi_reduction <add>, %19, %cst_8 [1] : vector<16x16xf32> to vector<16xf32>
    %21 = vector.shape_cast %20 : vector<16xf32> to vector<16x1xf32>
    %22 = arith.truncf %19 : vector<16x16xf32> to vector<16x16xbf16>
    %c0_9 = arith.constant 0 : index
    %c0_10 = arith.constant 0 : index
    %23 = vector.load %arg1[%c0_9, %c0_10] : memref<16x128xbf16, #tpu.memory_space<vmem>>, vector<16x128xbf16>
    %cst_11 = arith.constant dense<0.000000e+00> : vector<16x128xf32>
    %24 = tpu.matmul %22, %23, %cst_11 {dimension_numbers = #tpu.dot_dimension_numbers<[1], [0], [0], [1], [0, 0, 1, 1], [], []>} : vector<16x16xbf16>, vector<16x128xbf16>, vector<16x128xf32> -> vector<16x128xf32>
    %25 = tpu.reciprocal %21 {approx = true} : vector<16x1xf32> -> vector<16x1xf32>
    %26 = vector.broadcast %25 : vector<16x1xf32> to vector<16x128xf32>
    %27 = arith.mulf %24, %26 : vector<16x128xf32>
    %c0_12 = arith.constant 0 : index
    %c0_13 = arith.constant 0 : index
    %28 = vector.load %arg4[%c0_12, %c0_13] : memref<1x128xf32, #tpu.memory_space<vmem>>, vector<1x128xf32>
    %29 = vector.broadcast %28 : vector<1x128xf32> to vector<16x128xf32>
    %30 = arith.addf %27, %29 : vector<16x128xf32>
    %31 = tpu.iota {dimensions = array<i32: 1>} : vector<16x128xi32>
    %c4_i32 = arith.constant 4 : i32
    %32 = vector.broadcast %c4_i32 : i32 to vector<16x128xi32>
    %33 = arith.cmpi slt, %31, %32 : vector<16x128xi32>
    %cst_14 = arith.constant -1.000000e+30 : f32
    %34 = vector.broadcast %cst_14 : f32 to vector<16x128xf32>
    %35 = arith.select %33, %30, %34 : vector<16x128xi1>, vector<16x128xf32>
    %cst_15 = arith.constant dense<0xFF800000> : vector<16xf32>
    %36 = vector.multi_reduction <maximumf>, %35, %cst_15 [1] : vector<16x128xf32> to vector<16xf32>
    %37 = vector.shape_cast %36 : vector<16xf32> to vector<16x1xf32>
    %38 = vector.broadcast %37 : vector<16x1xf32> to vector<16x128xf32>
    %39 = arith.subf %35, %38 : vector<16x128xf32>
    %40 = math.exp %39 : vector<16x128xf32>
    %cst_16 = arith.constant dense<0.000000e+00> : vector<16xf32>
    %41 = vector.multi_reduction <add>, %40, %cst_16 [1] : vector<16x128xf32> to vector<16xf32>
    %42 = vector.shape_cast %41 : vector<16xf32> to vector<16x1xf32>
    %43 = math.log %42 : vector<16x1xf32>
    %44 = vector.broadcast %43 : vector<16x1xf32> to vector<16x128xf32>
    %45 = arith.subf %39, %44 : vector<16x128xf32>
    %c0_17 = arith.constant 0 : index
    %c0_18 = arith.constant 0 : index
    %46 = vector.load %arg6[%c0_17, %c0_18] : memref<16x128xf32, #tpu.memory_space<vmem>>, vector<16x128xf32>
    tpu.vector_store %arg6[%c0_17, %c0_18], %45 {strides = array<i32>} : memref<16x128xf32, #tpu.memory_space<vmem>>, vector<16x128xf32>,
    return
  }
  func.func @transform_0(%arg0: i32) -> (i32, i32) {
    %c0_i32 = arith.constant 0 : i32
    %c0_i32_0 = arith.constant 0 : i32
    %c0_i32_1 = arith.constant 0 : i32
    return %c0_i32, %c0_i32_0 : i32, i32
  }
  func.func @transform_1(%arg0: i32) -> (i32, i32) {
    %c0_i32 = arith.constant 0 : i32
    %c0_i32_0 = arith.constant 0 : i32
    %c0_i32_1 = arith.constant 0 : i32
    return %c0_i32, %c0_i32_0 : i32, i32
  }
  func.func @transform_2(%arg0: i32) -> (i32, i32) {
    %c0_i32 = arith.constant 0 : i32
    %c0_i32_0 = arith.constant 0 : i32
    return %arg0, %c0_i32 : i32, i32
  }
  func.func @transform_3(%arg0: i32) -> (i32, i32) {
    %c0_i32 = arith.constant 0 : i32
    %c0_i32_0 = arith.constant 0 : i32
    %c0_i32_1 = arith.constant 0 : i32
    return %c0_i32, %c0_i32_0 : i32, i32
  }
  func.func @transform_4(%arg0: i32) -> (i32, i32) {
    %c0_i32 = arith.constant 0 : i32
    %c0_i32_0 = arith.constant 0 : i32
    return %arg0, %c0_i32 : i32, i32
  }
  func.func @transform_5(%arg0: i32) -> (i32, i32) {
    %c0_i32 = arith.constant 0 : i32
    %c0_i32_0 = arith.constant 0 : i32
    return %arg0, %c0_i32 : i32, i32
  }
}

</mosaic_0001>

<llo_original>
// kernel: gat_forward.6
$region0: #{gat_forward.6}
  #allocation0 [shape = 'u32[]', space=smem, size = 0x4, offset = 0x4, fixed_abs, tag = 'smem constant byte address 0x4 - core index']
  #allocation1 [shape = 'u32[144,128]{1,0:T(1,128)}', space=vmem, size = 0x12000, scoped, tag = 'internal scratch']
  %s0 = inlined_call_operand.vmem [shape: bf16[16,128], index: 0, kind: input, shape index: {}]
  %s1 = inlined_call_operand.vmem [shape: bf16[128,128], index: 1, kind: input, shape index: {}]
  %s2 = inlined_call_operand.vmem [shape: f32[2,128], index: 2, kind: input, shape index: {}]
  %s3 = inlined_call_operand.vmem [shape: bf16[16,128], index: 3, kind: output, shape index: {0}]
  %s4 = inlined_call_operand.vmem [shape: f32[1,16], index: 4, kind: output, shape index: {1}]
  %s5 = inlined_call_operand.vmem [shape: f32[16,1], index: 5, kind: output, shape index: {2}]
  %6 = xla_tuple %s3, %s4, %s5
  %s7 = sld [smem:[#allocation0]]
  $region38: #{gat_forward.6} parent=0
    _
  %s9 = ssub.s32 1, %s7
  %s10 = scalar_select 0, %s9, %s7
  // Predicated region
  $region2: #{gat_forward.6} parent=0 // pred_check
    _
  $region3: #{gat_forward.6} parent=0 // pred_check_branch
    %12 = sbr.rel (0) target = $region5
  $region4: #{gat_forward.6} parent=0 // pred_region
    _
  $region5: #{gat_forward.6} parent=0 // pred_fallthru
    _
  // Predicated region
  $region6: #{gat_forward.6} parent=0 // pred_check
    _
  $region7: #{gat_forward.6} parent=0 // pred_check_branch
    %14 = sbr.rel (0) target = $region9
  $region8: #{gat_forward.6} parent=0 // pred_region
    _
  $region9: #{gat_forward.6} parent=0 // pred_fallthru
    _
  // Predicated region
  $region10: #{gat_forward.6} parent=0 // pred_check
    _
  $region11: #{gat_forward.6} parent=0 // pred_check_branch
    %16 = sbr.rel (0) target = $region13
  $region12: #{gat_forward.6} parent=0 // pred_region
    _
  $region13: #{gat_forward.6} parent=0 // pred_fallthru
    _
  %v18 = vld [vmem:[%s0] sm:$0xf]
  %v19 = vld [vmem:[%s0 + $0x4] sm:$0xf]
  %v20 = vld [vmem:[%s1] sm:$0xf]
  %v21 = vld [vmem:[%s1 + $0x4] sm:$0xf]
  %v22 = vld [vmem:[%s1 + $0x8] sm:$0xf]
  %v23 = vld [vmem:[%s1 + $0xc] sm:$0xf]
  %v24 = vld [vmem:[%s1 + $0x10] sm:$0xf]
  %v25 = vld [vmem:[%s1 + $0x14] sm:$0xf]
  %v26 = vld [vmem:[%s1 + $0x18] sm:$0xf]
  %v27 = vld [vmem:[%s1 + $0x1c] sm:$0xf]
  %v28 = vld [vmem:[%s1 + $0x20] sm:$0xf]
  %v29 = vld [vmem:[%s1 + $0x24] sm:$0xf]
  %v30 = vld [vmem:[%s1 + $0x28] sm:$0xf]
  %v31 = vld [vmem:[%s1 + $0x2c] sm:$0xf]
  %v32 = vld [vmem:[%s1 + $0x30] sm:$0xf]
  %v33 = vld [vmem:[%s1 + $0x34] sm:$0xf]
  %v34 = vld [vmem:[%s1 + $0x38] sm:$0xf]
  %v35 = vld [vmem:[%s1 + $0x3c] sm:$0xf]
  %v38 = vunpack.c.l.b16 %v18
  %v39 = vunpack.c.l.b16 %v19
  %v40 = vpack.c.b16 %v39, %v38
  %v58 = vunpack.c.l.b16 %v20
  %v59 = vunpack.c.l.b16 %v21
  %v60 = vunpack.c.l.b16 %v22
  %v61 = vunpack.c.l.b16 %v23
  %v62 = vunpack.c.l.b16 %v24
  %v63 = vunpack.c.l.b16 %v25
  %v64 = vunpack.c.l.b16 %v26
  %v65 = vunpack.c.l.b16 %v27
  %v66 = vunpack.c.l.b16 %v28
  %v67 = vunpack.c.l.b16 %v29
  %v68 = vunpack.c.l.b16 %v30
  %v69 = vunpack.c.l.b16 %v31
  %v70 = vunpack.c.l.b16 %v32
  %v71 = vunpack.c.l.b16 %v33
  %v72 = vunpack.c.l.b16 %v34
  %v73 = vunpack.c.l.b16 %v35
  %v74 = vpack.c.b16 %v59, %v58
  %v75 = vpack.c.b16 %v61, %v60
  %v76 = vpack.c.b16 %v63, %v62
  %v77 = vpack.c.b16 %v65, %v64
  %v78 = vpack.c.b16 %v67, %v66
  %v79 = vpack.c.b16 %v69, %v68
  %v80 = vpack.c.b16 %v71, %v70
  %v81 = vpack.c.b16 %v73, %v72
  %90 = vmatprep.subr.bf16.mxu0 0
  %91 = vmatpush1.bf16.msra.mxu0 %v74
  %92 = vmatprep.subr.bf16.mxu0 0
  %93 = vmatpush1.bf16.msra.mxu0 %v75
  %94 = vmatprep.subr.bf16.mxu0 0
  %95 = vmatpush1.bf16.msra.mxu0 %v76
  %96 = vmatprep.subr.bf16.mxu0 0
  %97 = vmatpush1.bf16.msra.mxu0 %v77
  %98 = vmatprep.subr.bf16.mxu0 0
  %99 = vmatpush1.bf16.msra.mxu0 %v78
  %100 = vmatprep.subr.bf16.mxu0 0
  %101 = vmatpush1.bf16.msra.mxu0 %v79
  %102 = vmatprep.subr.bf16.mxu0 0
  %103 = vmatpush1.bf16.msra.mxu0 %v80
  %104 = vmatprep.subr.bf16.mxu0 0
  %105 = vmatpush1.bf16.msra.mxu0 %v81
  %106 = vmatprep.subr.bf16.mxu0 0
  %107 = vmatpush1.bf16.msra.mxu0 0
  %108 = vmatprep.subr.bf16.mxu0 0
  %109 = vmatpush1.bf16.msra.mxu0 0
  %110 = vmatprep.subr.bf16.mxu0 0
  %111 = vmatpush1.bf16.msra.mxu0 0
  %112 = vmatprep.subr.bf16.mxu0 0
  %113 = vmatpush1.bf16.msra.mxu0 0
  %114 = vmatprep.subr.bf16.mxu0 0
  %115 = vmatpush1.bf16.msra.mxu0 0
  %116 = vmatprep.subr.bf16.mxu0 0
  %117 = vmatpush1.bf16.msra.mxu0 0
  %118 = vmatprep.subr.bf16.mxu0 0
  %119 = vmatpush1.bf16.msra.mxu0 0
  %120 = vmatprep.subr.bf16.mxu0 0
  %121 = vmatpush1.bf16.msra.mxu0 0
  %122 = vmatprep.mubr.bf16.mxu0 0
  %123 = vmatmul.mubr.bf16.gmra.mrb[0].mxu0 %v40
  %v124 = vpop.f32.mrb[0].mxu0
  %v125 = vadd.f32 0.0, %v124
  %v126 = vpop.f32.mrb[0].mxu0
  %v127 = vpop.f32.mrb[0].mxu0
  %v128 = vadd.f32 0.0, %v127
  %v129 = vpop.f32.mrb[0].mxu0
  %130 = vdwg.mxu0
  %v131 = vld [vmem:[%s2] sm:$0x3]
  %132 = vmatprep.subr.mxu0 0.0
  %133 = vmatpush1.xpose.msra.mxu0 %v125
  %134 = vmatprep.subr.mxu0 0.0
  %135 = vmatpush1.xpose.msra.mxu0 %v128
  %136 = vmatprep.subr.mxu0 0.0
  %137 = vmatpush1.xpose.msra.mxu0 0.0
  %138 = vmatprep.subr.mxu0 0.0
  %139 = vmatpush1.xpose.msra.mxu0 0.0
  %140 = vmatprep.subr.mxu0 0.0
  %141 = vmatpush1.xpose.msra.mxu0 0.0
  %142 = vmatprep.subr.mxu0 0.0
  %143 = vmatpush1.xpose.msra.mxu0 0.0
  %144 = vmatprep.subr.mxu0 0.0
  %145 = vmatpush1.xpose.msra.mxu0 0.0
  %146 = vmatprep.subr.mxu0 0.0
  %147 = vmatpush1.xpose.msra.mxu0 0.0
  %148 = vmatprep.subr.mxu0 0.0
  %149 = vmatpush1.xpose.msra.mxu0 0.0
  %150 = vmatprep.subr.mxu0 0.0
  %151 = vmatpush1.xpose.msra.mxu0 0.0
  %152 = vmatprep.subr.mxu0 0.0
  %153 = vmatpush1.xpose.msra.mxu0 0.0
  %154 = vmatprep.subr.mxu0 0.0
  %155 = vmatpush1.xpose.msra.mxu0 0.0
  %156 = vmatprep.subr.mxu0 0.0
  %157 = vmatpush1.xpose.msra.mxu0 0.0
  %158 = vmatprep.subr.mxu0 0.0
  %159 = vmatpush1.xpose.msra.mxu0 0.0
  %160 = vmatprep.subr.mxu0 0.0
  %161 = vmatpush1.xpose.msra.mxu0 0.0
  %162 = vmatprep.subr.mxu0 0.0
  %163 = vmatpush1.xpose.msra.mxu0 0.0
  %164 = vmatprep.subr.mxu0 0.0
  %165 = vmatpush1.xpose.msra.mxu0 0.0
  %166 = vmatprep.subr.mxu0 0.0
  %167 = vmatpush1.xpose.msra.mxu0 0.0
  %168 = vmatprep.subr.mxu0 0.0
  %169 = vmatpush1.xpose.msra.mxu0 0.0
  %170 = vmatprep.subr.mxu0 0.0
  %171 = vmatpush1.xpose.msra.mxu0 0.0
  %172 = vmatprep.subr.mxu0 0.0
  %173 = vmatpush1.xpose.msra.mxu0 0.0
  %174 = vmatprep.subr.mxu0 0.0
  %175 = vmatpush1.xpose.msra.mxu0 0.0
  %176 = vmatprep.subr.mxu0 0.0
  %177 = vmatpush1.xpose.msra.mxu0 0.0
  %178 = vmatprep.subr.mxu0 0.0
  %179 = vmatpush1.xpose.msra.mxu0 0.0
  %180 = vmatprep.subr.mxu0 0.0
  %181 = vmatpush1.xpose.msra.mxu0 0.0
  %182 = vmatprep.subr.mxu0 0.0
  %183 = vmatpush1.xpose.msra.mxu0 0.0
  %184 = vmatprep.subr.mxu0 0.0
  %185 = vmatpush1.xpose.msra.mxu0 0.0
  %186 = vmatprep.subr.mxu0 0.0
  %187 = vmatpush1.xpose.msra.mxu0 0.0
  %188 = vmatprep.subr.mxu0 0.0
  %189 = vmatpush1.xpose.msra.mxu0 0.0
  %190 = vmatprep.subr.mxu0 0.0
  %191 = vmatpush1.xpose.msra.mxu0 0.0
  %192 = vmatprep.subr.mxu0 0.0
  %193 = vmatpush1.xpose.msra.mxu0 0.0
  %194 = vmatprep.subr.mxu0 0.0
  %195 = vmatpush1.xpose.msra.mxu0 0.0
  %196 = vmatprep.mubr.f32.mxu0 0.0
  %197 = vmatmul.mubr.f32.gmra.mrb[0].mxu0 %v131
  %v198 = vpop.f32.mrb[0].mxu0
  %v199 = vadd.f32 0.0, %v198
  %v200 = vpop.f32.mrb[0].mxu0
  %201 = vdwg.mxu0
  %vm202 = vcmask 122880
  %203 = vst.msk [vmem:[%s4] sm:$0x1] %vm202, %v199
  %v204 = vlaneseq
  %v205 = vshrl.u32 %v204, 7
  %v206 = vsub.s32 1, %v205
  %v207 = vrot.slane %v131, %v206
  %v208 = vmul.f32 %v125, %v207
  %v209 = vmul.f32 %v128, %v207
  %210 = vadd.xlane.f32.xlu0 %v208
  %v211 = vpop.xlane.xlu0 %210
  %212 = vadd.xlane.f32.xlu0 %v209
  %v213 = vpop.xlane.xlu0 %212
  %vm214 = vcmask 7168
  %215 = vst.msk [vmem:[%s5] sm:$0xff] %vm214, %v211
  %216 = vst.msk [vmem:[%s5 + $0x8] sm:$0xff] %vm214, %v213
  %v217 = vpack.c.bf16 %v128, %v125
  %v219 = vunpack.c.l.b16 %v217
  %v220 = vunpack.c.h.b16 %v217
  %v221 = vpack.c.b16 %v219, %v219
  %v222 = vpack.c.b16 %v220, %v220
  %225 = vst [vmem:[%s3] sm:$0xf] %v221
  %226 = vst [vmem:[%s3 + $0x4] sm:$0xf] %v222
  // Predicated region
  $region14: #{gat_forward.6} parent=0 // pred_check
    _
  $region15: #{gat_forward.6} parent=0 // pred_check_branch
    %228 = sbr.rel (0) target = $region17
  $region16: #{gat_forward.6} parent=0 // pred_region
    _
  $region17: #{gat_forward.6} parent=0 // pred_fallthru
    _
  // Predicated region
  $region18: #{gat_forward.6} parent=0 // pred_check
    _
  $region19: #{gat_forward.6} parent=0 // pred_check_branch
    %230 = sbr.rel (0) target = $region21
  $region20: #{gat_forward.6} parent=0 // pred_region
    _
  $region21: #{gat_forward.6} parent=0 // pred_fallthru
    _
  // Predicated region
  $region22: #{gat_forward.6} parent=0 // pred_check
    _
  $region23: #{gat_forward.6} parent=0 // pred_check_branch
    %232 = sbr.rel (0) target = $region25
  $region24: #{gat_forward.6} parent=0 // pred_region
    _
  $region25: #{gat_forward.6} parent=0 // pred_fallthru
    _
  // Predicated region
  $region26: #{gat_forward.6} parent=0 // pred_check
    _
  $region27: #{gat_forward.6} parent=0 // pred_check_branch
    %234 = sbr.rel (0) target = $region29
  $region28: #{gat_forward.6} parent=0 // pred_region
    _
  $region29: #{gat_forward.6} parent=0 // pred_fallthru
    _
  // Predicated region
  $region30: #{gat_forward.6} parent=0 // pred_check
    _
  $region31: #{gat_forward.6} parent=0 // pred_check_branch
    %236 = sbr.rel (0) target = $region33
  $region32: #{gat_forward.6} parent=0 // pred_region
    _
  $region33: #{gat_forward.6} parent=0 // pred_fallthru
    _
  // Predicated region
  $region34: #{gat_forward.6} parent=0 // pred_check
    _
  $region35: #{gat_forward.6} parent=0 // pred_check_branch
    %238 = sbr.rel (0) target = $region37
  $region36: #{gat_forward.6} parent=0 // pred_region
    _
  $region37: #{gat_forward.6} parent=0 // pred_fallthru
    _

// kernel: gat_forward.5
$region0: #{gat_forward.5}
  #allocation0 [shape = 'u32[]', space=smem, size = 0x4, offset = 0x4, fixed_abs, tag = 'smem constant byte address 0x4 - core index']
  #allocation1 [shape = 'u32[144,128]{1,0:T(1,128)}', space=vmem, size = 0x12000, scoped, tag = 'internal scratch']
  %s0 = inlined_call_operand.vmem [shape: bf16[16,128], index: 0, kind: input, shape index: {}]
  %s1 = inlined_call_operand.vmem [shape: f32[1,16], index: 1, kind: input, shape index: {}]
  %s2 = inlined_call_operand.vmem [shape: f32[16,1], index: 2, kind: input, shape index: {}]
  %s3 = inlined_call_operand.vmem [shape: f32[1,128], index: 3, kind: input, shape index: {}]
  %s4 = inlined_call_operand.vmem [shape: bf16[16,16], index: 4, kind: input, shape index: {}]
  %s5 = inlined_call_operand.vmem [shape: bf16[16,128], index: 5, kind: output, shape index: {}]
  %s6 = sld [smem:[#allocation0]]
  $region30: #{gat_forward.5} parent=0
    _
  %s8 = ssub.s32 1, %s6
  %s9 = scalar_select 0, %s8, %s6
  // Predicated region
  $region2: #{gat_forward.5} parent=0 // pred_check
    _
  $region3: #{gat_forward.5} parent=0 // pred_check_branch
    %11 = sbr.rel (0) target = $region5
  $region4: #{gat_forward.5} parent=0 // pred_region
    _
  $region5: #{gat_forward.5} parent=0 // pred_fallthru
    _
  // Predicated region
  $region6: #{gat_forward.5} parent=0 // pred_check
    _
  $region7: #{gat_forward.5} parent=0 // pred_check_branch
    %13 = sbr.rel (0) target = $region9
  $region8: #{gat_forward.5} parent=0 // pred_region
    _
  $region9: #{gat_forward.5} parent=0 // pred_fallthru
    _
  // Predicated region
  $region10: #{gat_forward.5} parent=0 // pred_check
    _
  $region11: #{gat_forward.5} parent=0 // pred_check_branch
    %15 = sbr.rel (0) target = $region13
  $region12: #{gat_forward.5} parent=0 // pred_region
    _
  $region13: #{gat_forward.5} parent=0 // pred_fallthru
    _
  // Predicated region
  $region14: #{gat_forward.5} parent=0 // pred_check
    _
  $region15: #{gat_forward.5} parent=0 // pred_check_branch
    %17 = sbr.rel (0) target = $region17
  $region16: #{gat_forward.5} parent=0 // pred_region
    _
  $region17: #{gat_forward.5} parent=0 // pred_fallthru
    _
  // Predicated region
  $region18: #{gat_forward.5} parent=0 // pred_check
    _
  $region19: #{gat_forward.5} parent=0 // pred_check_branch
    %19 = sbr.rel (0) target = $region21
  $region20: #{gat_forward.5} parent=0 // pred_region
    _
  $region21: #{gat_forward.5} parent=0 // pred_fallthru
    _
  %v21 = vld [vmem:[%s2] sm:$0xff]
  %v22 = vld [vmem:[%s2 + $0x8] sm:$0xff]
  %v23 = vld [vmem:[%s1] sm:$0x1]
  %25 = vset.pattern.permute.xlu0 0
  %26 = vperm.xlu0 %25, %v21
  %v27 = vpop.permute.xlu0 %26
  %30 = vset.pattern.permute.xlu0 0
  %31 = vperm.xlu0 %30, %v22
  %v32 = vpop.permute.xlu0 %31
  %v35 = vlaneseq
  %v36 = vshrl.u32 %v35, 7
  %v37 = vsub.s32 0, %v36
  %v38 = vrot.slane %v23, %v37
  %v40 = vadd.f32 %v27, %v38
  %v41 = vadd.f32 %v32, %v38
  %v42 = vmul.f32 %v40, 0.2
  %v43 = vmul.f32 %v41, 0.2
  %v44 = vmax.f32 %v40, %v42
  %v45 = vmax.f32 %v41, %v43
  %v46 = vld [vmem:[%s4] sm:$0xf]
  %v47 = vld [vmem:[%s4 + $0x4] sm:$0xf]
  %v48 = vunpack.c.l.bf16 %v46
  %v49 = vunpack.c.l.bf16 %v47
  %vm50 = vcmp.gt.f32.partialorder %v48, 0.0
  %vm51 = vcmp.gt.f32.partialorder %v49, 0.0
  %v52 = vsel %vm50, %v44, -1e+30
  %v53 = vsel %vm51, %v45, -1e+30
  %vm54 = vcmask 130048
  %v55 = vsel %vm54, %v52, -inf
  %56 = vmax.xlane.f32.xlu0 %v55
  %v57 = vpop.xlane.xlu0 %56
  %v58 = vsel %vm54, %v53, -inf
  %59 = vmax.xlane.f32.xlu0 %v58
  %v60 = vpop.xlane.xlu0 %59
  %v61 = vsub.f32 %v52, %v57
  %v62 = vsub.f32 %v53, %v60
  %v63 = vmul.f32 %v61, 1.442695
  %v64 = vpow.pop %v63
  %v65 = vmul.f32 %v62, 1.442695
  %v66 = vpow.pop %v65
  %v67 = vmul.f32 %v48, %v64
  %v68 = vmul.f32 %v49, %v66
  %v69 = vsel %vm54, %v67, 0.0
  %70 = vadd.xlane.f32.xlu0 %v69
  %v71 = vpop.xlane.xlu0 %70
  %v72 = vsel %vm54, %v68, 0.0
  %73 = vadd.xlane.f32.xlu0 %v72
  %v74 = vpop.xlane.xlu0 %73
  %v75 = vpack.c.bf16 %v68, %v67
  %v76 = vld [vmem:[%s0] sm:$0xf]
  %v77 = vld [vmem:[%s0 + $0x4] sm:$0xf]
  %v80 = vunpack.c.l.b16 %v76
  %v81 = vunpack.c.l.b16 %v77
  %v82 = vpack.c.b16 %v81, %v80
  %v85 = vsel %vm54, %v75, 0
  %87 = vmatprep.subr.bf16.mxu0 0
  %88 = vmatpush1.bf16.msra.mxu0 %v82
  %89 = vmatprep.subr.bf16.mxu0 0
  %90 = vmatpush1.bf16.msra.mxu0 0
  %91 = vmatprep.subr.bf16.mxu0 0
  %92 = vmatpush1.bf16.msra.mxu0 0
  %93 = vmatprep.subr.bf16.mxu0 0
  %94 = vmatpush1.bf16.msra.mxu0 0
  %95 = vmatprep.subr.bf16.mxu0 0
  %96 = vmatpush1.bf16.msra.mxu0 0
  %97 = vmatprep.subr.bf16.mxu0 0
  %98 = vmatpush1.bf16.msra.mxu0 0
  %99 = vmatprep.subr.bf16.mxu0 0
  %100 = vmatpush1.bf16.msra.mxu0 0
  %101 = vmatprep.subr.bf16.mxu0 0
  %102 = vmatpush1.bf16.msra.mxu0 0
  %103 = vmatprep.subr.bf16.mxu0 0
  %104 = vmatpush1.bf16.msra.mxu0 0
  %105 = vmatprep.subr.bf16.mxu0 0
  %106 = vmatpush1.bf16.msra.mxu0 0
  %107 = vmatprep.subr.bf16.mxu0 0
  %108 = vmatpush1.bf16.msra.mxu0 0
  %109 = vmatprep.subr.bf16.mxu0 0
  %110 = vmatpush1.bf16.msra.mxu0 0
  %111 = vmatprep.subr.bf16.mxu0 0
  %112 = vmatpush1.bf16.msra.mxu0 0
  %113 = vmatprep.subr.bf16.mxu0 0
  %114 = vmatpush1.bf16.msra.mxu0 0
  %115 = vmatprep.subr.bf16.mxu0 0
  %116 = vmatpush1.bf16.msra.mxu0 0
  %117 = vmatprep.subr.bf16.mxu0 0
  %118 = vmatpush1.bf16.msra.mxu0 0
  %119 = vmatprep.mubr.bf16.mxu0 0
  %120 = vmatmul.mubr.bf16.gmra.mrb[0].mxu0 %v85
  %v121 = vpop.f32.mrb[0].mxu0
  %v122 = vadd.f32 0.0, %v121
  %v123 = vpop.f32.mrb[0].mxu0
  %v124 = vpop.f32.mrb[0].mxu0
  %v125 = vadd.f32 0.0, %v124
  %v126 = vpop.f32.mrb[0].mxu0
  %127 = vdwg.mxu0
  %v128 = vrcp.pop %v71
  %v129 = vrcp.pop %v74
  %v130 = vmul.f32 %v122, %v128
  %v131 = vmul.f32 %v125, %v129
  %v132 = vld [vmem:[%s3] sm:$0x1]
  %v134 = vlaneseq
  %v135 = vshrl.u32 %v134, 7
  %v136 = vsub.s32 0, %v135
  %v137 = vrot.slane %v132, %v136
  %v139 = vadd.f32 %v130, %v137
  %v140 = vadd.f32 %v131, %v137
  %v141 = vmax.f32 %v139, 0.0
  %v142 = vmax.f32 %v140, 0.0
  %v143 = vpack.c.bf16 %v142, %v141
  %v145 = vunpack.c.l.b16 %v143
  %v146 = vunpack.c.h.b16 %v143
  %v147 = vpack.c.b16 %v145, %v145
  %v148 = vpack.c.b16 %v146, %v146
  %151 = vst [vmem:[%s5] sm:$0xf] %v147
  %152 = vst [vmem:[%s5 + $0x4] sm:$0xf] %v148
  // Predicated region
  $region22: #{gat_forward.5} parent=0 // pred_check
    _
  $region23: #{gat_forward.5} parent=0 // pred_check_branch
    %154 = sbr.rel (0) target = $region25
  $region24: #{gat_forward.5} parent=0 // pred_region
    _
  $region25: #{gat_forward.5} parent=0 // pred_fallthru
    _
  // Predicated region
  $region26: #{gat_forward.5} parent=0 // pred_check
    _
  $region27: #{gat_forward.5} parent=0 // pred_check_branch
    %156 = sbr.rel (0) target = $region29
  $region28: #{gat_forward.5} parent=0 // pred_region
    _
  $region29: #{gat_forward.5} parent=0 // pred_fallthru
    _

// kernel: gat_forward.4
$region0: #{gat_forward.4}
  #allocation0 [shape = 'u32[]', space=smem, size = 0x4, offset = 0x4, fixed_abs, tag = 'smem constant byte address 0x4 - core index']
  #allocation1 [shape = 'u32[144,128]{1,0:T(1,128)}', space=vmem, size = 0x12000, scoped, tag = 'internal scratch']
  %s0 = inlined_call_operand.vmem [shape: f32[16,128], index: 0, kind: input, shape index: {}]
  %s1 = inlined_call_operand.vmem [shape: bf16[128,128], index: 1, kind: input, shape index: {}]
  %s2 = inlined_call_operand.vmem [shape: f32[2,128], index: 2, kind: input, shape index: {}]
  %s3 = inlined_call_operand.vmem [shape: bf16[16,128], index: 3, kind: output, shape index: {0}]
  %s4 = inlined_call_operand.vmem [shape: f32[1,16], index: 4, kind: output, shape index: {1}]
  %s5 = inlined_call_operand.vmem [shape: f32[16,1], index: 5, kind: output, shape index: {2}]
  %6 = xla_tuple %s3, %s4, %s5
  %s7 = sld [smem:[#allocation0]]
  $region38: #{gat_forward.4} parent=0
    _
  %s9 = ssub.s32 1, %s7
  %s10 = scalar_select 0, %s9, %s7
  // Predicated region
  $region2: #{gat_forward.4} parent=0 // pred_check
    _
  $region3: #{gat_forward.4} parent=0 // pred_check_branch
    %12 = sbr.rel (0) target = $region5
  $region4: #{gat_forward.4} parent=0 // pred_region
    _
  $region5: #{gat_forward.4} parent=0 // pred_fallthru
    _
  // Predicated region
  $region6: #{gat_forward.4} parent=0 // pred_check
    _
  $region7: #{gat_forward.4} parent=0 // pred_check_branch
    %14 = sbr.rel (0) target = $region9
  $region8: #{gat_forward.4} parent=0 // pred_region
    _
  $region9: #{gat_forward.4} parent=0 // pred_fallthru
    _
  // Predicated region
  $region10: #{gat_forward.4} parent=0 // pred_check
    _
  $region11: #{gat_forward.4} parent=0 // pred_check_branch
    %16 = sbr.rel (0) target = $region13
  $region12: #{gat_forward.4} parent=0 // pred_region
    _
  $region13: #{gat_forward.4} parent=0 // pred_fallthru
    _
  %v18 = vld [vmem:[%s0] sm:$0xff]
  %v19 = vld [vmem:[%s0 + $0x8] sm:$0xff]
  %v20 = vld [vmem:[%s1] sm:$0xf]
  %v21 = vld [vmem:[%s1 + $0x4] sm:$0xf]
  %v22 = vld [vmem:[%s1 + $0x8] sm:$0xf]
  %v23 = vld [vmem:[%s1 + $0xc] sm:$0xf]
  %v24 = vld [vmem:[%s1 + $0x10] sm:$0xf]
  %v25 = vld [vmem:[%s1 + $0x14] sm:$0xf]
  %v26 = vld [vmem:[%s1 + $0x18] sm:$0xf]
  %v27 = vld [vmem:[%s1 + $0x1c] sm:$0xf]
  %v28 = vld [vmem:[%s1 + $0x20] sm:$0xf]
  %v29 = vld [vmem:[%s1 + $0x24] sm:$0xf]
  %v30 = vld [vmem:[%s1 + $0x28] sm:$0xf]
  %v31 = vld [vmem:[%s1 + $0x2c] sm:$0xf]
  %v32 = vld [vmem:[%s1 + $0x30] sm:$0xf]
  %v33 = vld [vmem:[%s1 + $0x34] sm:$0xf]
  %v34 = vld [vmem:[%s1 + $0x38] sm:$0xf]
  %v35 = vld [vmem:[%s1 + $0x3c] sm:$0xf]
  %v36 = vpack.c.bf16 %v19, %v18
  %v53 = vunpack.c.l.b16 %v20
  %v54 = vunpack.c.l.b16 %v21
  %v55 = vunpack.c.l.b16 %v22
  %v56 = vunpack.c.l.b16 %v23
  %v57 = vunpack.c.l.b16 %v24
  %v58 = vunpack.c.l.b16 %v25
  %v59 = vunpack.c.l.b16 %v26
  %v60 = vunpack.c.l.b16 %v27
  %v61 = vunpack.c.l.b16 %v28
  %v62 = vunpack.c.l.b16 %v29
  %v63 = vunpack.c.l.b16 %v30
  %v64 = vunpack.c.l.b16 %v31
  %v65 = vunpack.c.l.b16 %v32
  %v66 = vunpack.c.l.b16 %v33
  %v67 = vunpack.c.l.b16 %v34
  %v68 = vunpack.c.l.b16 %v35
  %v69 = vpack.c.b16 %v54, %v53
  %v70 = vpack.c.b16 %v56, %v55
  %v71 = vpack.c.b16 %v58, %v57
  %v72 = vpack.c.b16 %v60, %v59
  %v73 = vpack.c.b16 %v62, %v61
  %v74 = vpack.c.b16 %v64, %v63
  %v75 = vpack.c.b16 %v66, %v65
  %v76 = vpack.c.b16 %v68, %v67
  %85 = vmatprep.subr.bf16.mxu0 0
  %86 = vmatpush1.bf16.msra.mxu0 %v69
  %87 = vmatprep.subr.bf16.mxu0 0
  %88 = vmatpush1.bf16.msra.mxu0 %v70
  %89 = vmatprep.subr.bf16.mxu0 0
  %90 = vmatpush1.bf16.msra.mxu0 %v71
  %91 = vmatprep.subr.bf16.mxu0 0
  %92 = vmatpush1.bf16.msra.mxu0 %v72
  %93 = vmatprep.subr.bf16.mxu0 0
  %94 = vmatpush1.bf16.msra.mxu0 %v73
  %95 = vmatprep.subr.bf16.mxu0 0
  %96 = vmatpush1.bf16.msra.mxu0 %v74
  %97 = vmatprep.subr.bf16.mxu0 0
  %98 = vmatpush1.bf16.msra.mxu0 %v75
  %99 = vmatprep.subr.bf16.mxu0 0
  %100 = vmatpush1.bf16.msra.mxu0 %v76
  %101 = vmatprep.subr.bf16.mxu0 0
  %102 = vmatpush1.bf16.msra.mxu0 0
  %103 = vmatprep.subr.bf16.mxu0 0
  %104 = vmatpush1.bf16.msra.mxu0 0
  %105 = vmatprep.subr.bf16.mxu0 0
  %106 = vmatpush1.bf16.msra.mxu0 0
  %107 = vmatprep.subr.bf16.mxu0 0
  %108 = vmatpush1.bf16.msra.mxu0 0
  %109 = vmatprep.subr.bf16.mxu0 0
  %110 = vmatpush1.bf16.msra.mxu0 0
  %111 = vmatprep.subr.bf16.mxu0 0
  %112 = vmatpush1.bf16.msra.mxu0 0
  %113 = vmatprep.subr.bf16.mxu0 0
  %114 = vmatpush1.bf16.msra.mxu0 0
  %115 = vmatprep.subr.bf16.mxu0 0
  %116 = vmatpush1.bf16.msra.mxu0 0
  %117 = vmatprep.mubr.bf16.mxu0 0
  %118 = vmatmul.mubr.bf16.gmra.mrb[0].mxu0 %v36
  %v119 = vpop.f32.mrb[0].mxu0
  %v120 = vadd.f32 0.0, %v119
  %v121 = vpop.f32.mrb[0].mxu0
  %v122 = vpop.f32.mrb[0].mxu0
  %v123 = vadd.f32 0.0, %v122
  %v124 = vpop.f32.mrb[0].mxu0
  %125 = vdwg.mxu0
  %v126 = vld [vmem:[%s2] sm:$0x3]
  %127 = vmatprep.subr.mxu0 0.0
  %128 = vmatpush1.xpose.msra.mxu0 %v120
  %129 = vmatprep.subr.mxu0 0.0
  %130 = vmatpush1.xpose.msra.mxu0 %v123
  %131 = vmatprep.subr.mxu0 0.0
  %132 = vmatpush1.xpose.msra.mxu0 0.0
  %133 = vmatprep.subr.mxu0 0.0
  %134 = vmatpush1.xpose.msra.mxu0 0.0
  %135 = vmatprep.subr.mxu0 0.0
  %136 = vmatpush1.xpose.msra.mxu0 0.0
  %137 = vmatprep.subr.mxu0 0.0
  %138 = vmatpush1.xpose.msra.mxu0 0.0
  %139 = vmatprep.subr.mxu0 0.0
  %140 = vmatpush1.xpose.msra.mxu0 0.0
  %141 = vmatprep.subr.mxu0 0.0
  %142 = vmatpush1.xpose.msra.mxu0 0.0
  %143 = vmatprep.subr.mxu0 0.0
  %144 = vmatpush1.xpose.msra.mxu0 0.0
  %145 = vmatprep.subr.mxu0 0.0
  %146 = vmatpush1.xpose.msra.mxu0 0.0
  %147 = vmatprep.subr.mxu0 0.0
  %148 = vmatpush1.xpose.msra.mxu0 0.0
  %149 = vmatprep.subr.mxu0 0.0
  %150 = vmatpush1.xpose.msra.mxu0 0.0
  %151 = vmatprep.subr.mxu0 0.0
  %152 = vmatpush1.xpose.msra.mxu0 0.0
  %153 = vmatprep.subr.mxu0 0.0
  %154 = vmatpush1.xpose.msra.mxu0 0.0
  %155 = vmatprep.subr.mxu0 0.0
  %156 = vmatpush1.xpose.msra.mxu0 0.0
  %157 = vmatprep.subr.mxu0 0.0
  %158 = vmatpush1.xpose.msra.mxu0 0.0
  %159 = vmatprep.subr.mxu0 0.0
  %160 = vmatpush1.xpose.msra.mxu0 0.0
  %161 = vmatprep.subr.mxu0 0.0
  %162 = vmatpush1.xpose.msra.mxu0 0.0
  %163 = vmatprep.subr.mxu0 0.0
  %164 = vmatpush1.xpose.msra.mxu0 0.0
  %165 = vmatprep.subr.mxu0 0.0
  %166 = vmatpush1.xpose.msra.mxu0 0.0
  %167 = vmatprep.subr.mxu0 0.0
  %168 = vmatpush1.xpose.msra.mxu0 0.0
  %169 = vmatprep.subr.mxu0 0.0
  %170 = vmatpush1.xpose.msra.mxu0 0.0
  %171 = vmatprep.subr.mxu0 0.0
  %172 = vmatpush1.xpose.msra.mxu0 0.0
  %173 = vmatprep.subr.mxu0 0.0
  %174 = vmatpush1.xpose.msra.mxu0 0.0
  %175 = vmatprep.subr.mxu0 0.0
  %176 = vmatpush1.xpose.msra.mxu0 0.0
  %177 = vmatprep.subr.mxu0 0.0
  %178 = vmatpush1.xpose.msra.mxu0 0.0
  %179 = vmatprep.subr.mxu0 0.0
  %180 = vmatpush1.xpose.msra.mxu0 0.0
  %181 = vmatprep.subr.mxu0 0.0
  %182 = vmatpush1.xpose.msra.mxu0 0.0
  %183 = vmatprep.subr.mxu0 0.0
  %184 = vmatpush1.xpose.msra.mxu0 0.0
  %185 = vmatprep.subr.mxu0 0.0
  %186 = vmatpush1.xpose.msra.mxu0 0.0
  %187 = vmatprep.subr.mxu0 0.0
  %188 = vmatpush1.xpose.msra.mxu0 0.0
  %189 = vmatprep.subr.mxu0 0.0
  %190 = vmatpush1.xpose.msra.mxu0 0.0
  %191 = vmatprep.mubr.f32.mxu0 0.0
  %192 = vmatmul.mubr.f32.gmra.mrb[0].mxu0 %v126
  %v193 = vpop.f32.mrb[0].mxu0
  %v194 = vadd.f32 0.0, %v193
  %v195 = vpop.f32.mrb[0].mxu0
  %196 = vdwg.mxu0
  %vm197 = vcmask 122880
  %198 = vst.msk [vmem:[%s4] sm:$0x1] %vm197, %v194
  %v199 = vlaneseq
  %v200 = vshrl.u32 %v199, 7
  %v201 = vsub.s32 1, %v200
  %v202 = vrot.slane %v126, %v201
  %v203 = vmul.f32 %v120, %v202
  %v204 = vmul.f32 %v123, %v202
  %205 = vadd.xlane.f32.xlu0 %v203
  %v206 = vpop.xlane.xlu0 %205
  %207 = vadd.xlane.f32.xlu0 %v204
  %v208 = vpop.xlane.xlu0 %207
  %vm209 = vcmask 7168
  %210 = vst.msk [vmem:[%s5] sm:$0xff] %vm209, %v206
  %211 = vst.msk [vmem:[%s5 + $0x8] sm:$0xff] %vm209, %v208
  %v212 = vpack.c.bf16 %v123, %v120
  %v214 = vunpack.c.l.b16 %v212
  %v215 = vunpack.c.h.b16 %v212
  %v216 = vpack.c.b16 %v214, %v214
  %v217 = vpack.c.b16 %v215, %v215
  %220 = vst [vmem:[%s3] sm:$0xf] %v216
  %221 = vst [vmem:[%s3 + $0x4] sm:$0xf] %v217
  // Predicated region
  $region14: #{gat_forward.4} parent=0 // pred_check
    _
  $region15: #{gat_forward.4} parent=0 // pred_check_branch
    %223 = sbr.rel (0) target = $region17
  $region16: #{gat_forward.4} parent=0 // pred_region
    _
  $region17: #{gat_forward.4} parent=0 // pred_fallthru
    _
  // Predicated region
  $region18: #{gat_forward.4} parent=0 // pred_check
    _
  $region19: #{gat_forward.4} parent=0 // pred_check_branch
    %225 = sbr.rel (0) target = $region21
  $region20: #{gat_forward.4} parent=0 // pred_region
    _
  $region21: #{gat_forward.4} parent=0 // pred_fallthru
    _
  // Predicated region
  $region22: #{gat_forward.4} parent=0 // pred_check
    _
  $region23: #{gat_forward.4} parent=0 // pred_check_branch
    %227 = sbr.rel (0) target = $region25
  $region24: #{gat_forward.4} parent=0 // pred_region
    _
  $region25: #{gat_forward.4} parent=0 // pred_fallthru
    _
  // Predicated region
  $region26: #{gat_forward.4} parent=0 // pred_check
    _
  $region27: #{gat_forward.4} parent=0 // pred_check_branch
    %229 = sbr.rel (0) target = $region29
  $region28: #{gat_forward.4} parent=0 // pred_region
    _
  $region29: #{gat_forward.4} parent=0 // pred_fallthru
    _
  // Predicated region
  $region30: #{gat_forward.4} parent=0 // pred_check
    _
  $region31: #{gat_forward.4} parent=0 // pred_check_branch
    %231 = sbr.rel (0) target = $region33
  $region32: #{gat_forward.4} parent=0 // pred_region
    _
  $region33: #{gat_forward.4} parent=0 // pred_fallthru
    _
  // Predicated region
  $region34: #{gat_forward.4} parent=0 // pred_check
    _
  $region35: #{gat_forward.4} parent=0 // pred_check_branch
    %233 = sbr.rel (0) target = $region37
  $region36: #{gat_forward.4} parent=0 // pred_region
    _
  $region37: #{gat_forward.4} parent=0 // pred_fallthru
    _

// kernel: gat_forward.7
$region0: #{gat_forward.7}
  #allocation0 [shape = 'u32[]', space=smem, size = 0x4, offset = 0x4, fixed_abs, tag = 'smem constant byte address 0x4 - core index']
  #allocation1 [shape = 'u32[144,128]{1,0:T(1,128)}', space=vmem, size = 0x12000, scoped, tag = 'internal scratch']
  %s0 = inlined_call_operand.vmem [shape: bf16[16,128], index: 0, kind: input, shape index: {}]
  %s1 = inlined_call_operand.vmem [shape: f32[1,16], index: 1, kind: input, shape index: {}]
  %s2 = inlined_call_operand.vmem [shape: f32[16,1], index: 2, kind: input, shape index: {}]
  %s3 = inlined_call_operand.vmem [shape: f32[1,128], index: 3, kind: input, shape index: {}]
  %s4 = inlined_call_operand.vmem [shape: bf16[16,16], index: 4, kind: input, shape index: {}]
  %s5 = inlined_call_operand.vmem [shape: f32[16,128], index: 5, kind: output, shape index: {}]
  %s6 = sld [smem:[#allocation0]]
  $region30: #{gat_forward.7} parent=0
    _
  %s8 = ssub.s32 1, %s6
  %s9 = scalar_select 0, %s8, %s6
  // Predicated region
  $region2: #{gat_forward.7} parent=0 // pred_check
    _
  $region3: #{gat_forward.7} parent=0 // pred_check_branch
    %11 = sbr.rel (0) target = $region5
  $region4: #{gat_forward.7} parent=0 // pred_region
    _
  $region5: #{gat_forward.7} parent=0 // pred_fallthru
    _
  // Predicated region
  $region6: #{gat_forward.7} parent=0 // pred_check
    _
  $region7: #{gat_forward.7} parent=0 // pred_check_branch
    %13 = sbr.rel (0) target = $region9
  $region8: #{gat_forward.7} parent=0 // pred_region
    _
  $region9: #{gat_forward.7} parent=0 // pred_fallthru
    _
  // Predicated region
  $region10: #{gat_forward.7} parent=0 // pred_check
    _
  $region11: #{gat_forward.7} parent=0 // pred_check_branch
    %15 = sbr.rel (0) target = $region13
  $region12: #{gat_forward.7} parent=0 // pred_region
    _
  $region13: #{gat_forward.7} parent=0 // pred_fallthru
    _
  // Predicated region
  $region14: #{gat_forward.7} parent=0 // pred_check
    _
  $region15: #{gat_forward.7} parent=0 // pred_check_branch
    %17 = sbr.rel (0) target = $region17
  $region16: #{gat_forward.7} parent=0 // pred_region
    _
  $region17: #{gat_forward.7} parent=0 // pred_fallthru
    _
  // Predicated region
  $region18: #{gat_forward.7} parent=0 // pred_check
    _
  $region19: #{gat_forward.7} parent=0 // pred_check_branch
    %19 = sbr.rel (0) target = $region21
  $region20: #{gat_forward.7} parent=0 // pred_region
    _
  $region21: #{gat_forward.7} parent=0 // pred_fallthru
    _
  %v21 = vld [vmem:[%s2] sm:$0xff]
  %v22 = vld [vmem:[%s2 + $0x8] sm:$0xff]
  %v23 = vld [vmem:[%s1] sm:$0x1]
  %25 = vset.pattern.permute.xlu0 0
  %26 = vperm.xlu0 %25, %v21
  %v27 = vpop.permute.xlu0 %26
  %30 = vset.pattern.permute.xlu0 0
  %31 = vperm.xlu0 %30, %v22
  %v32 = vpop.permute.xlu0 %31
  %v35 = vlaneseq
  %v36 = vshrl.u32 %v35, 7
  %v37 = vsub.s32 0, %v36
  %v38 = vrot.slane %v23, %v37
  %v40 = vadd.f32 %v27, %v38
  %v41 = vadd.f32 %v32, %v38
  %v42 = vmul.f32 %v40, 0.2
  %v43 = vmul.f32 %v41, 0.2
  %v44 = vmax.f32 %v40, %v42
  %v45 = vmax.f32 %v41, %v43
  %v46 = vld [vmem:[%s4] sm:$0xf]
  %v47 = vld [vmem:[%s4 + $0x4] sm:$0xf]
  %v48 = vunpack.c.l.bf16 %v46
  %v49 = vunpack.c.l.bf16 %v47
  %vm50 = vcmp.gt.f32.partialorder %v48, 0.0
  %vm51 = vcmp.gt.f32.partialorder %v49, 0.0
  %v52 = vsel %vm50, %v44, -1e+30
  %v53 = vsel %vm51, %v45, -1e+30
  %vm54 = vcmask 130048
  %v55 = vsel %vm54, %v52, -inf
  %56 = vmax.xlane.f32.xlu0 %v55
  %v57 = vpop.xlane.xlu0 %56
  %v58 = vsel %vm54, %v53, -inf
  %59 = vmax.xlane.f32.xlu0 %v58
  %v60 = vpop.xlane.xlu0 %59
  %v61 = vsub.f32 %v52, %v57
  %v62 = vsub.f32 %v53, %v60
  %v63 = vmul.f32 %v61, 1.442695
  %v64 = vpow.pop %v63
  %v65 = vmul.f32 %v62, 1.442695
  %v66 = vpow.pop %v65
  %v67 = vmul.f32 %v48, %v64
  %v68 = vmul.f32 %v49, %v66
  %v69 = vsel %vm54, %v67, 0.0
  %70 = vadd.xlane.f32.xlu0 %v69
  %v71 = vpop.xlane.xlu0 %70
  %v72 = vsel %vm54, %v68, 0.0
  %73 = vadd.xlane.f32.xlu0 %v72
  %v74 = vpop.xlane.xlu0 %73
  %v75 = vpack.c.bf16 %v68, %v67
  %v76 = vld [vmem:[%s0] sm:$0xf]
  %v77 = vld [vmem:[%s0 + $0x4] sm:$0xf]
  %v80 = vunpack.c.l.b16 %v76
  %v81 = vunpack.c.l.b16 %v77
  %v82 = vpack.c.b16 %v81, %v80
  %v85 = vsel %vm54, %v75, 0
  %87 = vmatprep.subr.bf16.mxu0 0
  %88 = vmatpush1.bf16.msra.mxu0 %v82
  %89 = vmatprep.subr.bf16.mxu0 0
  %90 = vmatpush1.bf16.msra.mxu0 0
  %91 = vmatprep.subr.bf16.mxu0 0
  %92 = vmatpush1.bf16.msra.mxu0 0
  %93 = vmatprep.subr.bf16.mxu0 0
  %94 = vmatpush1.bf16.msra.mxu0 0
  %95 = vmatprep.subr.bf16.mxu0 0
  %96 = vmatpush1.bf16.msra.mxu0 0
  %97 = vmatprep.subr.bf16.mxu0 0
  %98 = vmatpush1.bf16.msra.mxu0 0
  %99 = vmatprep.subr.bf16.mxu0 0
  %100 = vmatpush1.bf16.msra.mxu0 0
  %101 = vmatprep.subr.bf16.mxu0 0
  %102 = vmatpush1.bf16.msra.mxu0 0
  %103 = vmatprep.subr.bf16.mxu0 0
  %104 = vmatpush1.bf16.msra.mxu0 0
  %105 = vmatprep.subr.bf16.mxu0 0
  %106 = vmatpush1.bf16.msra.mxu0 0
  %107 = vmatprep.subr.bf16.mxu0 0
  %108 = vmatpush1.bf16.msra.mxu0 0
  %109 = vmatprep.subr.bf16.mxu0 0
  %110 = vmatpush1.bf16.msra.mxu0 0
  %111 = vmatprep.subr.bf16.mxu0 0
  %112 = vmatpush1.bf16.msra.mxu0 0
  %113 = vmatprep.subr.bf16.mxu0 0
  %114 = vmatpush1.bf16.msra.mxu0 0
  %115 = vmatprep.subr.bf16.mxu0 0
  %116 = vmatpush1.bf16.msra.mxu0 0
  %117 = vmatprep.subr.bf16.mxu0 0
  %118 = vmatpush1.bf16.msra.mxu0 0
  %119 = vmatprep.mubr.bf16.mxu0 0
  %120 = vmatmul.mubr.bf16.gmra.mrb[0].mxu0 %v85
  %v121 = vpop.f32.mrb[0].mxu0
  %v122 = vadd.f32 0.0, %v121
  %v123 = vpop.f32.mrb[0].mxu0
  %v124 = vpop.f32.mrb[0].mxu0
  %v125 = vadd.f32 0.0, %v124
  %v126 = vpop.f32.mrb[0].mxu0
  %127 = vdwg.mxu0
  %v128 = vrcp.pop %v71
  %v129 = vrcp.pop %v74
  %v130 = vmul.f32 %v122, %v128
  %v131 = vmul.f32 %v125, %v129
  %v132 = vld [vmem:[%s3] sm:$0x1]
  %v134 = vlaneseq
  %v135 = vshrl.u32 %v134, 7
  %v136 = vsub.s32 0, %v135
  %v137 = vrot.slane %v132, %v136
  %v139 = vadd.f32 %v130, %v137
  %v140 = vadd.f32 %v131, %v137
  %v141 = vlaneseq
  %v142 = vand.u32 %v141, 127
  %vm143 = vcmp.lt.s32.totalorder %v142, 4
  %v144 = vsel %vm143, %v139, -1e+30
  %v145 = vsel %vm143, %v140, -1e+30
  %146 = vmax.xlane.f32.xlu0 %v144
  %v147 = vpop.xlane.xlu0 %146
  %148 = vmax.xlane.f32.xlu0 %v145
  %v149 = vpop.xlane.xlu0 %148
  %v150 = vsub.f32 %v144, %v147
  %v151 = vsub.f32 %v145, %v149
  %v152 = vmul.f32 %v150, 1.442695
  %v153 = vpow.pop %v152
  %v154 = vmul.f32 %v151, 1.442695
  %v155 = vpow.pop %v154
  %156 = vadd.xlane.f32.xlu0 %v153
  %v157 = vpop.xlane.xlu0 %156
  %158 = vadd.xlane.f32.xlu0 %v155
  %v159 = vpop.xlane.xlu0 %158
  %v160 = vlog2.pop %v157
  %v161 = vmul.f32 %v160, 0.6931472
  %v162 = vlog2.pop %v159
  %v163 = vmul.f32 %v162, 0.6931472
  %v164 = vsub.f32 %v150, %v161
  %v165 = vsub.f32 %v151, %v163
  %166 = vst [vmem:[%s5] sm:$0xff] %v164
  %167 = vst [vmem:[%s5 + $0x8] sm:$0xff] %v165
  // Predicated region
  $region22: #{gat_forward.7} parent=0 // pred_check
    _
  $region23: #{gat_forward.7} parent=0 // pred_check_branch
    %169 = sbr.rel (0) target = $region25
  $region24: #{gat_forward.7} parent=0 // pred_region
    _
  $region25: #{gat_forward.7} parent=0 // pred_fallthru
    _
  // Predicated region
  $region26: #{gat_forward.7} parent=0 // pred_check
    _
  $region27: #{gat_forward.7} parent=0 // pred_check_branch
    %171 = sbr.rel (0) target = $region29
  $region28: #{gat_forward.7} parent=0 // pred_region
    _
  $region29: #{gat_forward.7} parent=0 // pred_fallthru
    _

</llo_original>
